<compile_context>
chip_gen: v6e
topology: v6e:2x2x1
jax: 0.10.0
libtpu: 0.0.40
codegen_flags: <defaults>
</compile_context>

<pallas_src>
import functools

import jax
import jax.numpy as jnp
from jax.experimental import pallas as pl
from jax.experimental.pallas import tpu as pltpu

_LANE = 128
_SUBLANE = 8


def _round_up(x, m):
    return ((x + m - 1) // m) * m


def _device_kind():
    try:
        return jax.devices()[0].device_kind.lower()
    except Exception:
        return ""


def _default_bf16_epilogue():
    # v5e has no bf16 VALU -> keep the hidden-layer epilogue in f32 there;
    # v6e / v7x do bias+ReLU+cast on the (tm, 512) hidden slab in bf16.
    return "v5" not in _device_kind()


def _num_tensorcores():
    # v7x has 2 TensorCores per chip; v5e / v6e have 1.
    return 2 if "v7" in _device_kind() else 1


def _default_tile_m():
    # Per-grid-step overhead ~0.35us -> favor big batch tiles; cap lower on v5e
    # (16 MiB scoped-VMEM default).
    return 512 if "v5" in _device_kind() else 1024


# --------------------------------------------------------------------------- #
# Kernel
# --------------------------------------------------------------------------- #
def _mlp_kernel(x_ref, w1_ref, b1_ref, w2_ref, b2_ref, o_ref, *, bf16_epilogue):
    """Fused Linear -> ReLU -> Linear -> ReLU on one (tm, .) batch tile."""
    w1 = w1_ref[...]
    # Layer 1: MXU matmul in weight dtype (bf16 or f32), f32 accumulation.
    h = jnp.dot(x_ref[...].astype(w1.dtype), w1, preferred_element_type=jnp.float32)
    if bf16_epilogue:
        # bias add + ReLU + pre-layer-2 cast in bf16 -> half the VALU work and
        # vreg footprint on the (tm, 512) hidden slab (v6e/v7x bf16 VALU).
        h = h.astype(jnp.bfloat16)
    h = jnp.maximum(h + b1_ref[...], 0.0)           # b1 is pre-cast to match dtype
    w2 = w2_ref[...]
    # Layer 2: MXU matmul, f32 accumulation; zero-padded rows of w2 are inert.
    o = jnp.dot(h.astype(w2.dtype), w2, preferred_element_type=jnp.float32)
    o = jnp.maximum(o + b2_ref[...], 0.0)
    o_ref[...] = o.astype(o_ref.dtype)              # lane-dense (tm, 128) store


# --------------------------------------------------------------------------- #
# One-time parameter prep (hoisted out of the hot path)
# --------------------------------------------------------------------------- #
def prepare_params(w1, b1, w2, b2, *, param_dtype=jnp.bfloat16, bf16_epilogue=None):
    """Pad feature dims to lane multiples and cast weights; do this ONCE and
    reuse the returned dict across forward calls.

    w1: (state_dim, l1); b1: (1, l1) or (l1,); w2: (l1, ls); b2: (1, ls) or (ls,).
    Zero padding is numerically inert: padded b1 entries are 0 and padded rows
    of w2 are 0.
    """
    if bf16_epilogue is None:
        bf16_epilogue = _default_bf16_epilogue()
    b1 = jnp.reshape(b1, (1, -1))
    b2 = jnp.reshape(b2, (1, -1))
    state_dim, l1 = w1.shape
    ls = w2.shape[1]
    assert w2.shape[0] == l1 and b1.shape[1] == l1 and b2.shape[1] == ls

    l1_p = _round_up(l1, _LANE)      # 400 -> 512
    ls_p = _round_up(ls, _LANE)      # 32  -> 128 (lane-dense output block)
    b1_dtype = jnp.bfloat16 if bf16_epilogue else jnp.float32

    # NOTE: state_dim (layer-1 K) is deliberately NOT padded to 128 so the input
    # can be passed to the kernel without any wrapper copy for aligned batches.
    w1_p = jnp.zeros((state_dim, l1_p), param_dtype).at[:, :l1].set(w1.astype(param_dtype))
    b1_p = jnp.zeros((1, l1_p), b1_dtype).at[:, :l1].set(b1.astype(b1_dtype))
    w2_p = jnp.zeros((l1_p, ls_p), param_dtype).at[:l1, :ls].set(w2.astype(param_dtype))
    b2_p = jnp.zeros((1, ls_p), jnp.float32).at[:, :ls].set(b2.astype(jnp.float32))

    return {
        "w1": w1_p, "b1": b1_p, "w2": w2_p, "b2": b2_p,
        "dims": (state_dim, l1, ls, l1_p, ls_p),
        "bf16_epilogue": bool(bf16_epilogue),
    }


# --------------------------------------------------------------------------- #
# Forward (hot path)
# --------------------------------------------------------------------------- #
def shared_state_embedding_forward(state, params, *, tile_m=None,
                                   out_dtype=jnp.bfloat16):
    """state: (B, state_dim); params from prepare_params(). Returns (B, ls)."""
    state_dim, l1, ls, l1_p, ls_p = params["dims"]
    B = state.shape[0]
    assert state.shape[1] == state_dim

    if tile_m is None:
        tile_m = _default_tile_m()

    # --- batch tile selection --------------------------------------------- #
    b_pad = max(_SUBLANE, _round_up(B, _SUBLANE))
    if b_pad <= tile_m:
        if _num_tensorcores() > 1 and b_pad >= 2 * _SUBLANE:
            # v7x: >= 2 grid steps so the "parallel" axis shards across both TCs.
            tm = _round_up(pl.cdiv(b_pad, 2), _SUBLANE)
        else:
            tm = b_pad
    else:
        # Derive tm from B so the zero-padded tail tile is as small as possible.
        n_tiles = pl.cdiv(b_pad, tile_m)
        tm = _round_up(pl.cdiv(b_pad, n_tiles), _SUBLANE)
    b_grid = _round_up(b_pad, tm)

    # --- input: skip the pad copy entirely when B already fits the grid ---- #
    if b_grid == B:
        x_p = state
    else:
        x_p = jnp.pad(state, ((0, b_grid - B), (0, 0)))

    grid = (b_grid // tm,)
    kernel = functools.partial(_mlp_kernel, bf16_epilogue=params["bf16_epilogue"])

    out = pl.pallas_call(
        kernel,
        out_shape=jax.ShapeDtypeStruct((b_grid, ls_p), out_dtype),
        grid=grid,
        in_specs=[
            # batch tile advances with the grid index
            pl.BlockSpec((tm, state_dim), lambda i: (i, 0)),
            # weights / biases: constant index_map -> DMA'd once, VMEM-resident
            pl.BlockSpec((state_dim, l1_p), lambda i: (0, 0)),
            pl.BlockSpec((1, l1_p), lambda i: (0, 0)),
            pl.BlockSpec((l1_p, ls_p), lambda i: (0, 0)),
            pl.BlockSpec((1, ls_p), lambda i: (0, 0)),
        ],
        out_specs=pl.BlockSpec((tm, ls_p), lambda i: (i, 0)),
        compiler_params=pltpu.CompilerParams(
            dimension_semantics=("parallel",)),      # batch tiles -> both v7x TCs
    )(x_p, params["w1"], params["b1"], params["w2"], params["b2"])

    return out[:B, :ls]


# --------------------------------------------------------------------------- #
# Reference / test harness
# --------------------------------------------------------------------------- #
def _xavier_normal(key, fan_in, fan_out):
    # Matches torch.nn.init.xavier_normal_: std = sqrt(2 / (fan_in + fan_out)).
    std = jnp.sqrt(2.0 / (fan_in + fan_out))
    # PyTorch weight is (out, in); we directly sample the transposed (in, out) layout.
    return jax.random.normal(key, (fan_in, fan_out), dtype=jnp.float32) * std


def reference_forward(state, w1, b1, w2, b2):
    h = jnp.maximum(jnp.dot(state, w1, precision="highest") + b1, 0.0)
    return jnp.maximum(jnp.dot(h, w2, precision="highest") + b2, 0.0)


if __name__ == "__main__":
    # args.state_dim = 16, args.ls = 32, l1 = 400 (as in the PyTorch module).
    batch, state_dim, l1, ls = 8, 16, 400, 32

    key = jax.random.PRNGKey(0)
    k_x, k_w1, k_w2, k_big = jax.random.split(key, 4)

    state = jax.random.normal(k_x, (batch, state_dim), dtype=jnp.float32)
    w1 = _xavier_normal(k_w1, state_dim, l1)        # (state_dim, l1)
    b1 = jnp.zeros((1, l1), dtype=jnp.float32)      # constant_ 0.0
    w2 = _xavier_normal(k_w2, l1, ls)               # (l1, ls)
    b2 = jnp.zeros((1, ls), dtype=jnp.float32)      # constant_ 0.0

    ref = reference_forward(state, w1, b1, w2, b2)

    # 1) f32-parameter path: parity check against a HIGHEST-precision reference
    #    (both paths use the MXU, so agreement is to f32-matmul tolerance).
    params_f32 = prepare_params(w1, b1, w2, b2, param_dtype=jnp.float32,
                                bf16_epilogue=False)
    out_f32 = shared_state_embedding_forward(state, params_f32,
                                             out_dtype=jnp.float32)
    out_f32 = jax.block_until_ready(out_f32)
    assert out_f32.shape == (batch, ls), out_f32.shape
    assert jnp.allclose(out_f32, ref, atol=1e-4, rtol=1e-4), "f32 path mismatch"

    # 2) default fast path: bf16 weights, bf16 output, chip-dependent bf16 epilogue.
    #    Params prepared ONCE and reused (hot path = pad-x + pallas_call).
    params = prepare_params(w1, b1, w2, b2)
    out_bf16 = shared_state_embedding_forward(state, params)
    out_bf16 = jax.block_until_ready(out_bf16)
    assert out_bf16.dtype == jnp.bfloat16
    assert jnp.allclose(out_bf16.astype(jnp.float32), ref,
                        atol=3e-2, rtol=3e-2), "bf16 path mismatch"

    # 3) batch-tiled path (B > tile_m, non-multiple): exercises the grid,
    #    resident weights, derived tile size, tail padding and output slicing.
    big_b = 300
    state_big = jax.random.normal(k_big, (big_b, state_dim), dtype=jnp.float32)
    out_big = shared_state_embedding_forward(state_big, params, tile_m=128)
    out_big = jax.block_until_ready(out_big)
    ref_big = reference_forward(state_big, w1, b1, w2, b2)
    assert out_big.shape == (big_b, ls), out_big.shape
    assert jnp.allclose(out_big.astype(jnp.float32), ref_big,
                        atol=3e-2, rtol=3e-2), "tiled path mismatch"

    print("KERNEL_OK")
</pallas_src>

<mosaic_0001>
module attributes {stable_mosaic.version = 11 : i64} {
  func.func @_mlp_kernel(%arg0: i32, %arg1: memref<8x16xf32, #tpu.memory_space<vmem>>, %arg2: memref<16x512xf32, #tpu.memory_space<vmem>>, %arg3: memref<1x512xf32, #tpu.memory_space<vmem>>, %arg4: memref<512x128xf32, #tpu.memory_space<vmem>>, %arg5: memref<1x128xf32, #tpu.memory_space<vmem>>, %arg6: memref<8x128xf32, #tpu.memory_space<vmem>>) attributes {dimension_semantics = [#tpu.dimension_semantics<parallel>], iteration_bounds = array<i64: 1>, scalar_prefetch = 0 : i64, scratch_operands = 0 : i64, tpu.core_type = #tpu.core_type<tc>, window_params = [{transform_indices = @transform_0, window_bounds = array<i64: 8, 16>}, {pipeline_mode = #tpu.pipeline_mode<synchronous>, transform_indices = @transform_1, window_bounds = array<i64: 16, 512>}, {pipeline_mode = #tpu.pipeline_mode<synchronous>, transform_indices = @transform_2, window_bounds = array<i64: 1, 512>}, {pipeline_mode = #tpu.pipeline_mode<synchronous>, transform_indices = @transform_3, window_bounds = array<i64: 512, 128>}, {pipeline_mode = #tpu.pipeline_mode<synchronous>, transform_indices = @transform_4, window_bounds = array<i64: 1, 128>}, {transform_indices = @transform_5, window_bounds = array<i64: 8, 128>}]} {
    %c0 = arith.constant 0 : index
    %c0_0 = arith.constant 0 : index
    %0 = vector.load %arg2[%c0, %c0_0] : memref<16x512xf32, #tpu.memory_space<vmem>>, vector<16x512xf32>
    %c0_1 = arith.constant 0 : index
    %c0_2 = arith.constant 0 : index
    %1 = vector.load %arg1[%c0_1, %c0_2] : memref<8x16xf32, #tpu.memory_space<vmem>>, vector<8x16xf32>
    %cst = arith.constant dense<0.000000e+00> : vector<8x512xf32>
    %2 = tpu.matmul %1, %0, %cst {dimension_numbers = #tpu.dot_dimension_numbers<[1], [0], [0], [1], [0, 0, 1, 1], [], []>} : vector<8x16xf32>, vector<16x512xf32>, vector<8x512xf32> -> vector<8x512xf32>
    %c0_3 = arith.constant 0 : index
    %c0_4 = arith.constant 0 : index
    %3 = vector.load %arg3[%c0_3, %c0_4] : memref<1x512xf32, #tpu.memory_space<vmem>>, vector<1x512xf32>
    %4 = vector.broadcast %3 : vector<1x512xf32> to vector<8x512xf32>
    %5 = arith.addf %2, %4 : vector<8x512xf32>
    %cst_5 = arith.constant 0.000000e+00 : f32
    %6 = vector.broadcast %cst_5 : f32 to vector<8x512xf32>
    %7 = arith.maximumf %5, %6 : vector<8x512xf32>
    %c0_6 = arith.constant 0 : index
    %c0_7 = arith.constant 0 : index
    %8 = vector.load %arg4[%c0_6, %c0_7] : memref<512x128xf32, #tpu.memory_space<vmem>>, vector<512x128xf32>
    %cst_8 = arith.constant dense<0.000000e+00> : vector<8x128xf32>
    %9 = tpu.matmul %7, %8, %cst_8 {dimension_numbers = #tpu.dot_dimension_numbers<[1], [0], [0], [1], [0, 0, 1, 1], [], []>} : vector<8x512xf32>, vector<512x128xf32>, vector<8x128xf32> -> vector<8x128xf32>
    %c0_9 = arith.constant 0 : index
    %c0_10 = arith.constant 0 : index
    %10 = vector.load %arg5[%c0_9, %c0_10] : memref<1x128xf32, #tpu.memory_space<vmem>>, vector<1x128xf32>
    %11 = vector.broadcast %10 : vector<1x128xf32> to vector<8x128xf32>
    %12 = arith.addf %9, %11 : vector<8x128xf32>
    %cst_11 = arith.constant 0.000000e+00 : f32
    %13 = vector.broadcast %cst_11 : f32 to vector<8x128xf32>
    %14 = arith.maximumf %12, %13 : vector<8x128xf32>
    %c0_12 = arith.constant 0 : index
    %c0_13 = arith.constant 0 : index
    %15 = vector.load %arg6[%c0_12, %c0_13] : memref<8x128xf32, #tpu.memory_space<vmem>>, vector<8x128xf32>
    tpu.vector_store %arg6[%c0_12, %c0_13], %14 {strides = array<i32>} : memref<8x128xf32, #tpu.memory_space<vmem>>, vector<8x128xf32>,
    return
  }
  func.func @transform_0(%arg0: i32) -> (i32, i32) {
    %c0_i32 = arith.constant 0 : i32
    %c0_i32_0 = arith.constant 0 : i32
    return %arg0, %c0_i32 : i32, i32
  }
  func.func @transform_1(%arg0: i32) -> (i32, i32) {
    %c0_i32 = arith.constant 0 : i32
    %c0_i32_0 = arith.constant 0 : i32
    %c0_i32_1 = arith.constant 0 : i32
    return %c0_i32, %c0_i32_0 : i32, i32
  }
  func.func @transform_2(%arg0: i32) -> (i32, i32) {
    %c0_i32 = arith.constant 0 : i32
    %c0_i32_0 = arith.constant 0 : i32
    %c0_i32_1 = arith.constant 0 : i32
    return %c0_i32, %c0_i32_0 : i32, i32
  }
  func.func @transform_3(%arg0: i32) -> (i32, i32) {
    %c0_i32 = arith.constant 0 : i32
    %c0_i32_0 = arith.constant 0 : i32
    %c0_i32_1 = arith.constant 0 : i32
    return %c0_i32, %c0_i32_0 : i32, i32
  }
  func.func @transform_4(%arg0: i32) -> (i32, i32) {
    %c0_i32 = arith.constant 0 : i32
    %c0_i32_0 = arith.constant 0 : i32
    %c0_i32_1 = arith.constant 0 : i32
    return %c0_i32, %c0_i32_0 : i32, i32
  }
  func.func @transform_5(%arg0: i32) -> (i32, i32) {
    %c0_i32 = arith.constant 0 : i32
    %c0_i32_0 = arith.constant 0 : i32
    return %arg0, %c0_i32 : i32, i32
  }
}

</mosaic_0001>

<llo_original>
// kernel: tpu_custom_call.1
$region0: #{tpu_custom_call.1}
  #allocation0 [shape = 'u32[]', space=smem, size = 0x4, offset = 0x4, fixed_abs, tag = 'smem constant byte address 0x4 - core index']
  #allocation1 [shape = 'u32[144,128]{1,0:T(1,128)}', space=vmem, size = 0x12000, scoped, tag = 'internal scratch']
  %s0 = inlined_call_operand.hbm [shape: f32[8,16], index: 0, kind: input, shape index: {}]
  %s1 = inlined_call_operand.hbm [shape: f32[16,512], index: 1, kind: input, shape index: {}]
  %s2 = inlined_call_operand.hbm [shape: f32[1,512], index: 2, kind: input, shape index: {}]
  %s3 = inlined_call_operand.hbm [shape: f32[512,128], index: 3, kind: input, shape index: {}]
  %s4 = inlined_call_operand.vmem [shape: f32[1,128], index: 4, kind: input, shape index: {}]
  %s5 = inlined_call_operand.hbm [shape: f32[8,128], index: 5, kind: output, shape index: {}]
  %s6 = sld [smem:[#allocation0]]
  $region46: #{tpu_custom_call.1} parent=0
    _
  %s8 = ssub.s32 1, %s6
  %s9 = scalar_select 0, %s8, %s6
  $region1: #{tpu_custom_call.1} parent=0
    #allocation2 [shape = 'u8[4096]{0}', space=vmem, size = 0x1000, scoped, tag = 'input window, operand 0, single buffered']
    #allocation3 [shape = 's32[1]{0}', space=sflag, size = 0x4, scoped, tag = 'scoped memory for tpu_custom_call.1']
    #allocation4 [shape = 's32[1]{0}', space=sflag, size = 0x4, scoped, tag = 'scoped memory for tpu_custom_call.1']
    #allocation5 [shape = 'u8[32768]{0}', space=vmem, size = 0x8000, scoped, tag = 'input window, operand 1, single buffered']
    #allocation6 [shape = 's32[1]{0}', space=sflag, size = 0x4, scoped, tag = 'scoped memory for tpu_custom_call.1']
    #allocation7 [shape = 'u8[2048]{0}', space=vmem, size = 0x800, scoped, tag = 'input window, operand 2, single buffered']
    #allocation8 [shape = 'u8[262144]{0}', space=vmem, size = 0x40000, scoped, tag = 'input window, operand 3, single buffered']
    #allocation9 [shape = 's32[1]{0}', space=sflag, size = 0x4, scoped, tag = 'scoped memory for tpu_custom_call.1']
    #allocation10 [shape = 'u8[4096]{0}', space=vmem, size = 0x1000, scoped, tag = 'output window, operand 0, single buffered']
    %10 = vsyncpa [#allocation3], 0
    %11 = vsyncpa [#allocation6], 0
    %12 = vsyncpa [#allocation9], 0
    %13 = vsyncpa [#allocation4], 0
    // Predicated region
    $region2: #{tpu_custom_call.1} parent=1 // pred_check
      _
    $region3: #{tpu_custom_call.1} parent=1 // pred_check_branch
      %15 = sbr.rel (0) target = $region5
    $region4: #{tpu_custom_call.1} parent=1 // pred_region
      %s17 = ssub.s32 128, 128
      %18 = vsyncadd [#allocation3], %s17
      %s20 = sshll.u32 [#allocation2], 4
      %s21 = int_to_ptr.vmem [resolvable:$true] %s20
      %23 = dma.hbm_to_vmem [thread:$0]  %s0, 128, %s21, [#allocation3]
    $region5: #{tpu_custom_call.1} parent=1 // pred_fallthru
      _
    // Predicated region
    $region6: #{tpu_custom_call.1} parent=1 // pred_check
      _
    $region7: #{tpu_custom_call.1} parent=1 // pred_check_branch
      %25 = sbr.rel (0) target = $region9
    $region8: #{tpu_custom_call.1} parent=1 // pred_region
      %s27 = ssub.s32 1024, 1024
      %28 = vsyncadd [#allocation6], %s27
      %s29 = sshll.u32 [#allocation5], 4
      %s30 = int_to_ptr.vmem [resolvable:$true] %s29
      %35 = dma.hbm_to_vmem [thread:$0]  %s1, 1024, %s30, [#allocation6], 512, 512, 32
    $region9: #{tpu_custom_call.1} parent=1 // pred_fallthru
      _
    // Predicated region
    $region10: #{tpu_custom_call.1} parent=1 // pred_check
      _
    $region11: #{tpu_custom_call.1} parent=1 // pred_check_branch
      %37 = sbr.rel (0) target = $region13
    $region12: #{tpu_custom_call.1} parent=1 // pred_region
      %s39 = ssub.s32 64, 64
      %40 = vsyncadd [#allocation6], %s39
      %s42 = sshll.u32 [#allocation7], 4
      %s43 = int_to_ptr.vmem [resolvable:$true] %s42
      %45 = dma.hbm_to_vmem [thread:$0]  %s2, 64, %s43, [#allocation6]
    $region13: #{tpu_custom_call.1} parent=1 // pred_fallthru
      _
    // Predicated region
    $region14: #{tpu_custom_call.1} parent=1 // pred_check
      _
    $region15: #{tpu_custom_call.1} parent=1 // pred_check_branch
      %47 = sbr.rel (0) target = $region17
    $region16: #{tpu_custom_call.1} parent=1 // pred_region
      %s49 = ssub.s32 8192, 8192
      %50 = vsyncadd [#allocation9], %s49
      %s51 = sshll.u32 [#allocation8], 4
      %s52 = int_to_ptr.vmem [resolvable:$true] %s51
      %57 = dma.hbm_to_vmem [thread:$0]  %s3, 8192, %s52, [#allocation9], 128, 128, 8
    $region17: #{tpu_custom_call.1} parent=1 // pred_fallthru
      _
    // Predicated region
    $region18: #{tpu_custom_call.1} parent=1 // pred_check
      _
    $region19: #{tpu_custom_call.1} parent=1 // pred_check_branch
      %59 = sbr.rel (0) target = $region21
    $region20: #{tpu_custom_call.1} parent=1 // pred_region
      _
    $region21: #{tpu_custom_call.1} parent=1 // pred_fallthru
      _
    // Predicated region
    $region22: #{tpu_custom_call.1} parent=1 // pred_check
      _
    $region23: #{tpu_custom_call.1} parent=1 // pred_check_branch
      %61 = sbr.rel (0) target = $region25
    $region24: #{tpu_custom_call.1} parent=1 // pred_region
      %62 = dma.done [#allocation3], 128
    $region25: #{tpu_custom_call.1} parent=1 // pred_fallthru
      _
    // Predicated region
    $region26: #{tpu_custom_call.1} parent=1 // pred_check
      _
    $region27: #{tpu_custom_call.1} parent=1 // pred_check_branch
      %64 = sbr.rel (0) target = $region29
    $region28: #{tpu_custom_call.1} parent=1 // pred_region
      %65 = dma.done [#allocation6], 1024
    $region29: #{tpu_custom_call.1} parent=1 // pred_fallthru
      _
    // Predicated region
    $region30: #{tpu_custom_call.1} parent=1 // pred_check
      _
    $region31: #{tpu_custom_call.1} parent=1 // pred_check_branch
      %67 = sbr.rel (0) target = $region33
    $region32: #{tpu_custom_call.1} parent=1 // pred_region
      %68 = dma.done [#allocation6], 64
    $region33: #{tpu_custom_call.1} parent=1 // pred_fallthru
      _
    // Predicated region
    $region34: #{tpu_custom_call.1} parent=1 // pred_check
      _
    $region35: #{tpu_custom_call.1} parent=1 // pred_check_branch
      %70 = sbr.rel (0) target = $region37
    $region36: #{tpu_custom_call.1} parent=1 // pred_region
      %71 = dma.done [#allocation9], 8192
    $region37: #{tpu_custom_call.1} parent=1 // pred_fallthru
      _
    %v72 = vld [vmem:[#allocation5] sm:$0xff]
    %v73 = vld [vmem:[#allocation5 + $0x8] sm:$0xff]
    %v74 = vld [vmem:[#allocation5 + $0x10] sm:$0xff]
    %v75 = vld [vmem:[#allocation5 + $0x18] sm:$0xff]
    %v76 = vld [vmem:[#allocation5 + $0x20] sm:$0xff]
    %v77 = vld [vmem:[#allocation5 + $0x28] sm:$0xff]
    %v78 = vld [vmem:[#allocation5 + $0x30] sm:$0xff]
    %v79 = vld [vmem:[#allocation5 + $0x38] sm:$0xff]
    %v80 = vld [vmem:[#allocation2] sm:$0xff]
    %v81 = vld [vmem:[#allocation7] sm:$0xf]
    %v83 = vlaneseq
    %v84 = vshrl.u32 %v83, 7
    %v85 = vsub.s32 0, %v84
    %v86 = vrot.slane %v81, %v85
    %v87 = vlaneseq
    %v88 = vshrl.u32 %v87, 7
    %v89 = vsub.s32 1, %v88
    %v90 = vrot.slane %v81, %v89
    %v91 = vlaneseq
    %v92 = vshrl.u32 %v91, 7
    %v93 = vsub.s32 2, %v92
    %v94 = vrot.slane %v81, %v93
    %v95 = vlaneseq
    %v96 = vshrl.u32 %v95, 7
    %v97 = vsub.s32 3, %v96
    %v98 = vrot.slane %v81, %v97
    %vm103 = vcmask 130048
    %v105 = vsel %vm103, %v80, 0
    %107 = vmatprep.subr.mxu0 0.0
    %108 = vmatpush1.msra.mxu0 0.0
    %109 = vmatprep.subr.mxu0 0.0
    %110 = vmatpush1.msra.mxu0 0.0
    %111 = vmatprep.subr.mxu0 0.0
    %112 = vmatpush1.msra.mxu0 0.0
    %113 = vmatprep.subr.mxu0 0.0
    %114 = vmatpush1.msra.mxu0 0.0
    %115 = vmatprep.subr.mxu0 0.0
    %116 = vmatpush1.msra.mxu0 0.0
    %117 = vmatprep.subr.mxu0 0.0
    %118 = vmatpush1.msra.mxu0 0.0
    %119 = vmatprep.subr.mxu0 0.0
    %120 = vmatpush1.msra.mxu0 0.0
    %121 = vmatprep.subr.mxu0 0.0
    %122 = vmatpush1.msra.mxu0 0.0
    %123 = vmatprep.subr.mxu0 0.0
    %124 = vmatpush1.msra.mxu0 0.0
    %125 = vmatprep.subr.mxu0 0.0
    %126 = vmatpush1.msra.mxu0 0.0
    %127 = vmatprep.subr.mxu0 0.0
    %128 = vmatpush1.msra.mxu0 0.0
    %129 = vmatprep.subr.mxu0 0.0
    %130 = vmatpush1.msra.mxu0 0.0
    %131 = vmatprep.subr.mxu0 0.0
    %132 = vmatpush1.msra.mxu0 0.0
    %133 = vmatprep.subr.mxu0 0.0
    %134 = vmatpush1.msra.mxu0 0.0
    %135 = vmatprep.subr.mxu0 %v77
    %136 = vmatpush1.msra.mxu0 %v76
    %137 = vmatprep.subr.mxu0 %v73
    %138 = vmatpush1.msra.mxu0 %v72
    %139 = vmatprep.subr.mxu0 0.0
    %140 = vmatpush2.msra.mxu0 0.0
    %141 = vmatprep.subr.mxu0 0.0
    %142 = vmatpush2.msra.mxu0 0.0
    %143 = vmatprep.subr.mxu0 0.0
    %144 = vmatpush2.msra.mxu0 0.0
    %145 = vmatprep.subr.mxu0 0.0
    %146 = vmatpush2.msra.mxu0 0.0
    %147 = vmatprep.subr.mxu0 0.0
    %148 = vmatpush2.msra.mxu0 0.0
    %149 = vmatprep.subr.mxu0 0.0
    %150 = vmatpush2.msra.mxu0 0.0
    %151 = vmatprep.subr.mxu0 0.0
    %152 = vmatpush2.msra.mxu0 0.0
    %153 = vmatprep.subr.mxu0 0.0
    %154 = vmatpush2.msra.mxu0 0.0
    %155 = vmatprep.subr.mxu0 0.0
    %156 = vmatpush2.msra.mxu0 0.0
    %157 = vmatprep.subr.mxu0 0.0
    %158 = vmatpush2.msra.mxu0 0.0
    %159 = vmatprep.subr.mxu0 0.0
    %160 = vmatpush2.msra.mxu0 0.0
    %161 = vmatprep.subr.mxu0 0.0
    %162 = vmatpush2.msra.mxu0 0.0
    %163 = vmatprep.subr.mxu0 0.0
    %164 = vmatpush2.msra.mxu0 0.0
    %165 = vmatprep.subr.mxu0 0.0
    %166 = vmatpush2.msra.mxu0 0.0
    %167 = vmatprep.subr.mxu0 0.0
    %168 = vmatpush2.msra.mxu0 0.0
    %169 = vmatprep.subr.mxu0 0.0
    %170 = vmatpush2.msra.mxu0 0.0
    %171 = vmatprep.mubr.f32.mxu0 0.0
    %172 = vmatmul.mubr.f32.gmra.mxu0 %v105
    %v173 = vpop.f32.mrf.mxu0
    %v174 = vadd.f32 %v86, %v173
    %v175 = vpop.f32.mrf.mxu0
    %v176 = vadd.f32 %v90, %v175
    %177 = vdwg.mxu0
    %178 = vmatprep.subr.mxu0 0.0
    %179 = vmatpush1.msra.mxu0 0.0
    %180 = vmatprep.subr.mxu0 0.0
    %181 = vmatpush1.msra.mxu0 0.0
    %182 = vmatprep.subr.mxu0 0.0
    %183 = vmatpush1.msra.mxu0 0.0
    %184 = vmatprep.subr.mxu0 0.0
    %185 = vmatpush1.msra.mxu0 0.0
    %186 = vmatprep.subr.mxu0 0.0
    %187 = vmatpush1.msra.mxu0 0.0
    %188 = vmatprep.subr.mxu0 0.0
    %189 = vmatpush1.msra.mxu0 0.0
    %190 = vmatprep.subr.mxu0 0.0
    %191 = vmatpush1.msra.mxu0 0.0
    %192 = vmatprep.subr.mxu0 0.0
    %193 = vmatpush1.msra.mxu0 0.0
    %194 = vmatprep.subr.mxu0 0.0
    %195 = vmatpush1.msra.mxu0 0.0
    %196 = vmatprep.subr.mxu0 0.0
    %197 = vmatpush1.msra.mxu0 0.0
    %198 = vmatprep.subr.mxu0 0.0
    %199 = vmatpush1.msra.mxu0 0.0
    %200 = vmatprep.subr.mxu0 0.0
    %201 = vmatpush1.msra.mxu0 0.0
    %202 = vmatprep.subr.mxu0 0.0
    %203 = vmatpush1.msra.mxu0 0.0
    %204 = vmatprep.subr.mxu0 0.0
    %205 = vmatpush1.msra.mxu0 0.0
    %206 = vmatprep.subr.mxu0 %v79
    %207 = vmatpush1.msra.mxu0 %v78
    %208 = vmatprep.subr.mxu0 %v75
    %209 = vmatpush1.msra.mxu0 %v74
    %210 = vmatprep.subr.mxu0 0.0
    %211 = vmatpush2.msra.mxu0 0.0
    %212 = vmatprep.subr.mxu0 0.0
    %213 = vmatpush2.msra.mxu0 0.0
    %214 = vmatprep.subr.mxu0 0.0
    %215 = vmatpush2.msra.mxu0 0.0
    %216 = vmatprep.subr.mxu0 0.0
    %217 = vmatpush2.msra.mxu0 0.0
    %218 = vmatprep.subr.mxu0 0.0
    %219 = vmatpush2.msra.mxu0 0.0
    %220 = vmatprep.subr.mxu0 0.0
    %221 = vmatpush2.msra.mxu0 0.0
    %222 = vmatprep.subr.mxu0 0.0
    %223 = vmatpush2.msra.mxu0 0.0
    %224 = vmatprep.subr.mxu0 0.0
    %225 = vmatpush2.msra.mxu0 0.0
    %226 = vmatprep.subr.mxu0 0.0
    %227 = vmatpush2.msra.mxu0 0.0
    %228 = vmatprep.subr.mxu0 0.0
    %229 = vmatpush2.msra.mxu0 0.0
    %230 = vmatprep.subr.mxu0 0.0
    %231 = vmatpush2.msra.mxu0 0.0
    %232 = vmatprep.subr.mxu0 0.0
    %233 = vmatpush2.msra.mxu0 0.0
    %234 = vmatprep.subr.mxu0 0.0
    %235 = vmatpush2.msra.mxu0 0.0
    %236 = vmatprep.subr.mxu0 0.0
    %237 = vmatpush2.msra.mxu0 0.0
    %238 = vmatprep.subr.mxu0 0.0
    %239 = vmatpush2.msra.mxu0 0.0
    %240 = vmatprep.subr.mxu0 0.0
    %241 = vmatpush2.msra.mxu0 0.0
    %242 = vmatprep.mubr.f32.mxu0 0.0
    %243 = vmatmul.mubr.f32.gmra.mxu0 %v105
    %v244 = vpop.f32.mrf.mxu0
    %v245 = vadd.f32 %v94, %v244
    %v246 = vpop.f32.mrf.mxu0
    %v247 = vadd.f32 %v98, %v246
    %248 = vdwg.mxu0
    %v249 = vmax.f32 %v174, 0.0
    %v250 = vmax.f32 %v176, 0.0
    %v251 = vmax.f32 %v245, 0.0
    %v252 = vmax.f32 %v247, 0.0
    %v253 = vld [vmem:[#allocation8] sm:$0xff]
    %v254 = vld [vmem:[#allocation8 + $0x8] sm:$0xff]
    %v255 = vld [vmem:[#allocation8 + $0x10] sm:$0xff]
    %v256 = vld [vmem:[#allocation8 + $0x18] sm:$0xff]
    %v257 = vld [vmem:[#allocation8 + $0x20] sm:$0xff]
    %v258 = vld [vmem:[#allocation8 + $0x28] sm:$0xff]
    %v259 = vld [vmem:[#allocation8 + $0x30] sm:$0xff]
    %v260 = vld [vmem:[#allocation8 + $0x38] sm:$0xff]
    %v261 = vld [vmem:[#allocation8 + $0x40] sm:$0xff]
    %v262 = vld [vmem:[#allocation8 + $0x48] sm:$0xff]
    %v263 = vld [vmem:[#allocation8 + $0x50] sm:$0xff]
    %v264 = vld [vmem:[#allocation8 + $0x58] sm:$0xff]
    %v265 = vld [vmem:[#allocation8 + $0x60] sm:$0xff]
    %v266 = vld [vmem:[#allocation8 + $0x68] sm:$0xff]
    %v267 = vld [vmem:[#allocation8 + $0x70] sm:$0xff]
    %v268 = vld [vmem:[#allocation8 + $0x78] sm:$0xff]
    %v269 = vld [vmem:[#allocation8 + $0x80] sm:$0xff]
    %v270 = vld [vmem:[#allocation8 + $0x88] sm:$0xff]
    %v271 = vld [vmem:[#allocation8 + $0x90] sm:$0xff]
    %v272 = vld [vmem:[#allocation8 + $0x98] sm:$0xff]
    %v273 = vld [vmem:[#allocation8 + $0xa0] sm:$0xff]
    %v274 = vld [vmem:[#allocation8 + $0xa8] sm:$0xff]
    %v275 = vld [vmem:[#allocation8 + $0xb0] sm:$0xff]
    %v276 = vld [vmem:[#allocation8 + $0xb8] sm:$0xff]
    %v277 = vld [vmem:[#allocation8 + $0xc0] sm:$0xff]
    %v278 = vld [vmem:[#allocation8 + $0xc8] sm:$0xff]
    %v279 = vld [vmem:[#allocation8 + $0xd0] sm:$0xff]
    %v280 = vld [vmem:[#allocation8 + $0xd8] sm:$0xff]
    %v281 = vld [vmem:[#allocation8 + $0xe0] sm:$0xff]
    %v282 = vld [vmem:[#allocation8 + $0xe8] sm:$0xff]
    %v283 = vld [vmem:[#allocation8 + $0xf0] sm:$0xff]
    %v284 = vld [vmem:[#allocation8 + $0xf8] sm:$0xff]
    %v285 = vld [vmem:[#allocation8 + $0x100] sm:$0xff]
    %v286 = vld [vmem:[#allocation8 + $0x108] sm:$0xff]
    %v287 = vld [vmem:[#allocation8 + $0x110] sm:$0xff]
    %v288 = vld [vmem:[#allocation8 + $0x118] sm:$0xff]
    %v289 = vld [vmem:[#allocation8 + $0x120] sm:$0xff]
    %v290 = vld [vmem:[#allocation8 + $0x128] sm:$0xff]
    %v291 = vld [vmem:[#allocation8 + $0x130] sm:$0xff]
    %v292 = vld [vmem:[#allocation8 + $0x138] sm:$0xff]
    %v293 = vld [vmem:[#allocation8 + $0x140] sm:$0xff]
    %v294 = vld [vmem:[#allocation8 + $0x148] sm:$0xff]
    %v295 = vld [vmem:[#allocation8 + $0x150] sm:$0xff]
    %v296 = vld [vmem:[#allocation8 + $0x158] sm:$0xff]
    %v297 = vld [vmem:[#allocation8 + $0x160] sm:$0xff]
    %v298 = vld [vmem:[#allocation8 + $0x168] sm:$0xff]
    %v299 = vld [vmem:[#allocation8 + $0x170] sm:$0xff]
    %v300 = vld [vmem:[#allocation8 + $0x178] sm:$0xff]
    %v301 = vld [vmem:[#allocation8 + $0x180] sm:$0xff]
    %v302 = vld [vmem:[#allocation8 + $0x188] sm:$0xff]
    %v303 = vld [vmem:[#allocation8 + $0x190] sm:$0xff]
    %v304 = vld [vmem:[#allocation8 + $0x198] sm:$0xff]
    %v305 = vld [vmem:[#allocation8 + $0x1a0] sm:$0xff]
    %v306 = vld [vmem:[#allocation8 + $0x1a8] sm:$0xff]
    %v307 = vld [vmem:[#allocation8 + $0x1b0] sm:$0xff]
    %v308 = vld [vmem:[#allocation8 + $0x1b8] sm:$0xff]
    %v309 = vld [vmem:[#allocation8 + $0x1c0] sm:$0xff]
    %v310 = vld [vmem:[#allocation8 + $0x1c8] sm:$0xff]
    %v311 = vld [vmem:[#allocation8 + $0x1d0] sm:$0xff]
    %v312 = vld [vmem:[#allocation8 + $0x1d8] sm:$0xff]
    %v313 = vld [vmem:[#allocation8 + $0x1e0] sm:$0xff]
    %v314 = vld [vmem:[#allocation8 + $0x1e8] sm:$0xff]
    %v315 = vld [vmem:[#allocation8 + $0x1f0] sm:$0xff]
    %v316 = vld [vmem:[#allocation8 + $0x1f8] sm:$0xff]
    %v317 = vld [vmem:[%s4] sm:$0x1]
    %v319 = vlaneseq
    %v320 = vshrl.u32 %v319, 7
    %v321 = vsub.s32 0, %v320
    %v322 = vrot.slane %v317, %v321
    %324 = vmatprep.subr.mxu0 0.0
    %325 = vmatpush1.msra.mxu0 %v268
    %326 = vmatprep.subr.mxu0 0.0
    %327 = vmatpush1.msra.mxu0 %v267
    %328 = vmatprep.subr.mxu0 0.0
    %329 = vmatpush1.msra.mxu0 %v266
    %330 = vmatprep.subr.mxu0 0.0
    %331 = vmatpush1.msra.mxu0 %v265
    %332 = vmatprep.subr.mxu0 0.0
    %333 = vmatpush1.msra.mxu0 %v264
    %334 = vmatprep.subr.mxu0 0.0
    %335 = vmatpush1.msra.mxu0 %v263
    %336 = vmatprep.subr.mxu0 0.0
    %337 = vmatpush1.msra.mxu0 %v262
    %338 = vmatprep.subr.mxu0 0.0
    %339 = vmatpush1.msra.mxu0 %v261
    %340 = vmatprep.subr.mxu0 0.0
    %341 = vmatpush1.msra.mxu0 %v260
    %342 = vmatprep.subr.mxu0 0.0
    %343 = vmatpush1.msra.mxu0 %v259
    %344 = vmatprep.subr.mxu0 0.0
    %345 = vmatpush1.msra.mxu0 %v258
    %346 = vmatprep.subr.mxu0 0.0
    %347 = vmatpush1.msra.mxu0 %v257
    %348 = vmatprep.subr.mxu0 0.0
    %349 = vmatpush1.msra.mxu0 %v256
    %350 = vmatprep.subr.mxu0 0.0
    %351 = vmatpush1.msra.mxu0 %v255
    %352 = vmatprep.subr.mxu0 0.0
    %353 = vmatpush1.msra.mxu0 %v254
    %354 = vmatprep.subr.mxu0 0.0
    %355 = vmatpush1.msra.mxu0 %v253
    %356 = vmatprep.subr.mxu0 0.0
    %357 = vmatpush2.msra.mxu0 %v284
    %358 = vmatprep.subr.mxu0 0.0
    %359 = vmatpush2.msra.mxu0 %v283
    %360 = vmatprep.subr.mxu0 0.0
    %361 = vmatpush2.msra.mxu0 %v282
    %362 = vmatprep.subr.mxu0 0.0
    %363 = vmatpush2.msra.mxu0 %v281
    %364 = vmatprep.subr.mxu0 0.0
    %365 = vmatpush2.msra.mxu0 %v280
    %366 = vmatprep.subr.mxu0 0.0
    %367 = vmatpush2.msra.mxu0 %v279
    %368 = vmatprep.subr.mxu0 0.0
    %369 = vmatpush2.msra.mxu0 %v278
    %370 = vmatprep.subr.mxu0 0.0
    %371 = vmatpush2.msra.mxu0 %v277
    %372 = vmatprep.subr.mxu0 0.0
    %373 = vmatpush2.msra.mxu0 %v276
    %374 = vmatprep.subr.mxu0 0.0
    %375 = vmatpush2.msra.mxu0 %v275
    %376 = vmatprep.subr.mxu0 0.0
    %377 = vmatpush2.msra.mxu0 %v274
    %378 = vmatprep.subr.mxu0 0.0
    %379 = vmatpush2.msra.mxu0 %v273
    %380 = vmatprep.subr.mxu0 0.0
    %381 = vmatpush2.msra.mxu0 %v272
    %382 = vmatprep.subr.mxu0 0.0
    %383 = vmatpush2.msra.mxu0 %v271
    %384 = vmatprep.subr.mxu0 0.0
    %385 = vmatpush2.msra.mxu0 %v270
    %386 = vmatprep.subr.mxu0 0.0
    %387 = vmatpush2.msra.mxu0 %v269
    %388 = vmatprep.mubr.f32.mxu0 %v250
    %389 = vmatmul.mubr.f32.gmra.mxu0 %v249
    %v390 = vpop.f32.mrf.mxu0
    %v391 = vadd.f32 %v322, %v390
    %v392 = vpop.f32.mrf.mxu0
    %393 = vdwg.mxu0
    %394 = vmatprep.subr.mxu0 0.0
    %395 = vmatpush1.msra.mxu0 %v300
    %396 = vmatprep.subr.mxu0 0.0
    %397 = vmatpush1.msra.mxu0 %v299
    %398 = vmatprep.subr.mxu0 0.0
    %399 = vmatpush1.msra.mxu0 %v298
    %400 = vmatprep.subr.mxu0 0.0
    %401 = vmatpush1.msra.mxu0 %v297
    %402 = vmatprep.subr.mxu0 0.0
    %403 = vmatpush1.msra.mxu0 %v296
    %404 = vmatprep.subr.mxu0 0.0
    %405 = vmatpush1.msra.mxu0 %v295
    %406 = vmatprep.subr.mxu0 0.0
    %407 = vmatpush1.msra.mxu0 %v294
    %408 = vmatprep.subr.mxu0 0.0
    %409 = vmatpush1.msra.mxu0 %v293
    %410 = vmatprep.subr.mxu0 0.0
    %411 = vmatpush1.msra.mxu0 %v292
    %412 = vmatprep.subr.mxu0 0.0
    %413 = vmatpush1.msra.mxu0 %v291
    %414 = vmatprep.subr.mxu0 0.0
    %415 = vmatpush1.msra.mxu0 %v290
    %416 = vmatprep.subr.mxu0 0.0
    %417 = vmatpush1.msra.mxu0 %v289
    %418 = vmatprep.subr.mxu0 0.0
    %419 = vmatpush1.msra.mxu0 %v288
    %420 = vmatprep.subr.mxu0 0.0
    %421 = vmatpush1.msra.mxu0 %v287
    %422 = vmatprep.subr.mxu0 0.0
    %423 = vmatpush1.msra.mxu0 %v286
    %424 = vmatprep.subr.mxu0 0.0
    %425 = vmatpush1.msra.mxu0 %v285
    %426 = vmatprep.subr.mxu0 0.0
    %427 = vmatpush2.msra.mxu0 %v316
    %428 = vmatprep.subr.mxu0 0.0
    %429 = vmatpush2.msra.mxu0 %v315
    %430 = vmatprep.subr.mxu0 0.0
    %431 = vmatpush2.msra.mxu0 %v314
    %432 = vmatprep.subr.mxu0 0.0
    %433 = vmatpush2.msra.mxu0 %v313
    %434 = vmatprep.subr.mxu0 0.0
    %435 = vmatpush2.msra.mxu0 %v312
    %436 = vmatprep.subr.mxu0 0.0
    %437 = vmatpush2.msra.mxu0 %v311
    %438 = vmatprep.subr.mxu0 0.0
    %439 = vmatpush2.msra.mxu0 %v310
    %440 = vmatprep.subr.mxu0 0.0
    %441 = vmatpush2.msra.mxu0 %v309
    %442 = vmatprep.subr.mxu0 0.0
    %443 = vmatpush2.msra.mxu0 %v308
    %444 = vmatprep.subr.mxu0 0.0
    %445 = vmatpush2.msra.mxu0 %v307
    %446 = vmatprep.subr.mxu0 0.0
    %447 = vmatpush2.msra.mxu0 %v306
    %448 = vmatprep.subr.mxu0 0.0
    %449 = vmatpush2.msra.mxu0 %v305
    %450 = vmatprep.subr.mxu0 0.0
    %451 = vmatpush2.msra.mxu0 %v304
    %452 = vmatprep.subr.mxu0 0.0
    %453 = vmatpush2.msra.mxu0 %v303
    %454 = vmatprep.subr.mxu0 0.0
    %455 = vmatpush2.msra.mxu0 %v302
    %456 = vmatprep.subr.mxu0 0.0
    %457 = vmatpush2.msra.mxu0 %v301
    %458 = vmatprep.mubr.f32.mxu0 %v252
    %459 = vmatmul.mubr.f32.gmra.mxu0 %v251
    %v460 = vpop.f32.mrf.mxu0
    %v461 = vadd.f32 %v391, %v460
    %v462 = vpop.f32.mrf.mxu0
    %463 = vdwg.mxu0
    %v464 = vmax.f32 %v461, 0.0
    %465 = vst [vmem:[#allocation10] sm:$0xff] %v464
    // Predicated region
    $region38: #{tpu_custom_call.1} parent=1 // pred_check
      _
    $region39: #{tpu_custom_call.1} parent=1 // pred_check_branch
      %467 = sbr.rel (0) target = $region41
    $region40: #{tpu_custom_call.1} parent=1 // pred_region
      %s469 = ssub.s32 128, 128
      %470 = vsyncadd [#allocation4], %s469
      %s472 = sshll.u32 [#allocation10], 4
      %s473 = int_to_ptr.vmem [resolvable:$true] %s472
      %475 = dma.vmem_to_hbm [thread:$0]  %s473, 128, %s5, [#allocation4]
    $region41: #{tpu_custom_call.1} parent=1 // pred_fallthru
      _
    // Predicated region
    $region42: #{tpu_custom_call.1} parent=1 // pred_check
      _
    $region43: #{tpu_custom_call.1} parent=1 // pred_check_branch
      %477 = sbr.rel (0) target = $region45
    $region44: #{tpu_custom_call.1} parent=1 // pred_region
      %478 = dma.done [#allocation4], 128
    $region45: #{tpu_custom_call.1} parent=1 // pred_fallthru
      _
    %479 = vsyncpa [#allocation3], 1
    %480 = vsyncpa [#allocation6], 1
    %481 = vsyncpa [#allocation9], 1
    %482 = vsyncpa [#allocation4], 1

</llo_original>
